<compile_context>
chip_gen: v5e
topology: v5e:2x2
jax: 0.10.0
libtpu: 0.0.40
codegen_flags: <defaults>
</compile_context>

<pallas_src>
import functools

import jax
import jax.numpy as jnp
from jax import lax
from jax.experimental import pallas as pl
from jax.experimental.pallas import tpu as pltpu


# At least 128 (v5e) / 256 (v6e, v7x) rows per tile keeps the MXU LHS fed
# full-height; tiles stay well under the 32 MiB scoped-VMEM limit on all gens.
_TB_MAX = 256


def lang_project_kernel(l_ref, mask_ref, w1_ref, b1_ref, w2_ref, b2_ref, out_ref):
    # l_ref:    (TB, T, C_in)   native dtype (bf16 or f32), C_in on the lane axis
    # mask_ref: (TB, T, 1)      f32
    # w1_ref:   (C_out, C_in)   f32, PyTorch (out, in) layout
    # b1_ref:   (1, C_out)      f32
    # w2_ref:   (C_out, C_out)  f32, PyTorch (out, in) layout
    # b2_ref:   (1, C_out)      f32
    # out_ref:  (TB, C_out)     f32 (lane-dense 2-D store)
    l = l_ref[...]
    m = mask_ref[...]                                   # (TB, T, 1)

    # Masked mean pooling over T (sublane reduction; f32 accumulation only).
    lm = l * m.astype(l.dtype)                          # binary mask -> exact in bf16
    num = jnp.sum(lm.astype(jnp.float32), axis=1)       # (TB, C_in)
    den = jnp.sum(m.astype(jnp.float32), axis=1)        # (TB, 1)
    # Guard all-invalid rows; approx=False keeps exact parity with the
    # reference (flip to approx=True if ~1e-3 relative error is acceptable).
    inv = pl.reciprocal(jnp.maximum(den, 1.0), approx=False)
    pooled = num * inv                                  # (TB, C_in) f32

    # Linear -> ReLU -> Linear. Weights stay in PyTorch (out, in) layout:
    # contract dim 1 of the activations with dim 1 of the weight (x @ W.T).
    dn = (((1,), (1,)), ((), ()))
    h = lax.dot_general(pooled, w1_ref[...], dn,
                        preferred_element_type=jnp.float32) + b1_ref[...]
    h = jnp.maximum(h, 0.0)
    o = lax.dot_general(h, w2_ref[...], dn,
                        preferred_element_type=jnp.float32) + b2_ref[...]

    out_ref[...] = o.astype(out_ref.dtype)


@functools.partial(jax.jit, static_argnames=())
def lang_project(x, l, l_mask, w1, b1, w2, b2):
    """x is unused (kept for interface parity with the PyTorch module)."""
    del x
    B, c_in, T = l.shape
    c_out = w1.shape[0]

    # Layout plumbing only — no dtype cast of `l`, no weight transposes.
    # TODO(synk): produce `l` upstream in (B, T, C_in) layout so this transpose
    # (one extra XLA pass over the largest operand) disappears entirely.
    l_t = jnp.transpose(l, (0, 2, 1))                   # (B, T, C_in)
    mask = l_mask.astype(jnp.float32)                   # (B, T, 1), tiny
    b1_r = b1.reshape(1, c_out)                         # free contiguous reshape
    b2_r = b2.reshape(1, c_out)

    tb = B if B <= _TB_MAX else _TB_MAX                 # multiple of 8 when tiled
    grid = (pl.cdiv(B, tb),)

    itemsize = jnp.dtype(l.dtype).itemsize
    bytes_accessed = int(
        B * c_in * T * itemsize            # l
        + B * T * 4                        # mask
        + (c_in * c_out + c_out * c_out + 2 * c_out) * 4   # params
        + B * c_out * 4                    # output
    )
    flops = int(2 * B * c_in * T + 2 * B * (c_in * c_out + c_out * c_out))
    cost = pl.CostEstimate(flops=flops, transcendentals=int(B),
                           bytes_accessed=bytes_accessed)

    out2d = pl.pallas_call(
        lang_project_kernel,
        out_shape=jax.ShapeDtypeStruct((B, c_out), jnp.float32),
        grid=grid,
        in_specs=[
            pl.BlockSpec((tb, T, c_in), lambda i: (i, 0, 0)),     # l tile
            pl.BlockSpec((tb, T, 1), lambda i: (i, 0, 0)),        # mask tile
            pl.BlockSpec((c_out, c_in), lambda i: (0, 0)),        # w1 (resident)
            pl.BlockSpec((1, c_out), lambda i: (0, 0)),           # b1 (resident)
            pl.BlockSpec((c_out, c_out), lambda i: (0, 0)),       # w2 (resident)
            pl.BlockSpec((1, c_out), lambda i: (0, 0)),           # b2 (resident)
        ],
        out_specs=pl.BlockSpec((tb, c_out), lambda i: (i, 0)),    # lane-dense 2-D
        compiler_params=pltpu.CompilerParams(
            dimension_semantics=("parallel",),
            vmem_limit_bytes=32 * 1024 * 1024,   # explicit: fits v7x's 64 MiB too
        ),
        cost_estimate=cost,
    )(l_t, mask, w1, b1_r, w2, b2_r)

    return out2d[:, None, :]                             # unsqueeze(1), free


def reference(l, l_mask, w1, b1, w2, b2):
    m = jnp.transpose(l_mask, (0, 2, 1)).astype(jnp.float32)
    lf = l.astype(jnp.float32)
    pooled = jnp.sum(lf * m, axis=-1) / jnp.sum(m, axis=-1)
    h = jnp.maximum(pooled @ w1.T + b1, 0.0)
    o = h @ w2.T + b2
    return o[:, None, :]


if __name__ == "__main__":
    key = jax.random.PRNGKey(0)
    k_l, k_w1, k_b1, k_w2, k_b2, k_x = jax.random.split(key, 6)

    B, T = 2, 8
    l_in_channels, l_out_channels = 32, 32

    # x is unused by the forward; included for interface completeness.
    x = jax.random.normal(k_x, (2, 4, 16, 16), dtype=jnp.float32)
    l = jax.random.normal(k_l, (B, l_in_channels, T), dtype=jnp.float32)
    # Binary validity mask (B, T, 1); at least one valid token per row.
    lengths = jnp.array([5, 3], dtype=jnp.int32)
    l_mask = (jnp.arange(T)[None, :] < lengths[:, None]).astype(jnp.float32)[:, :, None]

    # PyTorch Linear layout: weight (out, in), bias (out,).
    w1 = 0.1 * jax.random.normal(k_w1, (l_out_channels, l_in_channels), jnp.float32)
    b1 = 0.1 * jax.random.normal(k_b1, (l_out_channels,), jnp.float32)
    w2 = 0.1 * jax.random.normal(k_w2, (l_out_channels, l_out_channels), jnp.float32)
    b2 = 0.1 * jax.random.normal(k_b2, (l_out_channels,), jnp.float32)

    # f32 path: exact parity with the reference.
    out = jax.block_until_ready(lang_project(x, l, l_mask, w1, b1, w2, b2))
    ref = reference(l, l_mask, w1, b1, w2, b2)
    assert out.shape == (B, 1, l_out_channels), out.shape
    assert jnp.allclose(out, ref, atol=1e-5, rtol=1e-5), \
        float(jnp.max(jnp.abs(out - ref)))

    # bf16 path: `l` stays bf16 through HBM/DMA/multiply; only the pooling
    # accumulation is f32 (mask is binary so the bf16 multiply is exact).
    l_bf16 = l.astype(jnp.bfloat16)
    out_bf = jax.block_until_ready(lang_project(x, l_bf16, l_mask, w1, b1, w2, b2))
    ref_bf = reference(l_bf16, l_mask, w1, b1, w2, b2)
    assert jnp.allclose(out_bf, ref_bf, atol=1e-2, rtol=1e-2), \
        float(jnp.max(jnp.abs(out_bf - ref_bf)))

    print("KERNEL_OK")
</pallas_src>

<mosaic_0001>
module attributes {stable_mosaic.version = 11 : i64} {
  func.func @lang_project_kernel(%arg0: i32, %arg1: memref<2x8x32xf32, #tpu.memory_space<vmem>>, %arg2: memref<2x8x1xf32, #tpu.memory_space<vmem>>, %arg3: memref<32x32xf32, #tpu.memory_space<vmem>>, %arg4: memref<1x32xf32, #tpu.memory_space<vmem>>, %arg5: memref<32x32xf32, #tpu.memory_space<vmem>>, %arg6: memref<1x32xf32, #tpu.memory_space<vmem>>, %arg7: memref<2x32xf32, #tpu.memory_space<vmem>>) attributes {dimension_semantics = [#tpu.dimension_semantics<parallel>], iteration_bounds = array<i64: 1>, scalar_prefetch = 0 : i64, scratch_operands = 0 : i64, tpu.core_type = #tpu.core_type<tc>, window_params = [{transform_indices = @transform_0, window_bounds = array<i64: 2, 8, 32>}, {transform_indices = @transform_1, window_bounds = array<i64: 2, 8, 1>}, {pipeline_mode = #tpu.pipeline_mode<synchronous>, transform_indices = @transform_2, window_bounds = array<i64: 32, 32>}, {pipeline_mode = #tpu.pipeline_mode<synchronous>, transform_indices = @transform_3, window_bounds = array<i64: 1, 32>}, {pipeline_mode = #tpu.pipeline_mode<synchronous>, transform_indices = @transform_4, window_bounds = array<i64: 32, 32>}, {pipeline_mode = #tpu.pipeline_mode<synchronous>, transform_indices = @transform_5, window_bounds = array<i64: 1, 32>}, {transform_indices = @transform_6, window_bounds = array<i64: 2, 32>}]} {
    %c0 = arith.constant 0 : index
    %c0_0 = arith.constant 0 : index
    %c0_1 = arith.constant 0 : index
    %0 = vector.load %arg1[%c0, %c0_0, %c0_1] : memref<2x8x32xf32, #tpu.memory_space<vmem>>, vector<2x8x32xf32>
    %c0_2 = arith.constant 0 : index
    %c0_3 = arith.constant 0 : index
    %c0_4 = arith.constant 0 : index
    %1 = vector.load %arg2[%c0_2, %c0_3, %c0_4] : memref<2x8x1xf32, #tpu.memory_space<vmem>>, vector<2x8x1xf32>
    %2 = vector.broadcast %1 : vector<2x8x1xf32> to vector<2x8x32xf32>
    %3 = arith.mulf %0, %2 : vector<2x8x32xf32>
    %cst = arith.constant dense<0.000000e+00> : vector<2x32xf32>
    %4 = vector.multi_reduction <add>, %3, %cst [1] : vector<2x8x32xf32> to vector<2x32xf32>
    %cst_5 = arith.constant dense<0.000000e+00> : vector<2x1xf32>
    %5 = vector.multi_reduction <add>, %1, %cst_5 [1] : vector<2x8x1xf32> to vector<2x1xf32>
    %cst_6 = arith.constant 1.000000e+00 : f32
    %6 = vector.broadcast %cst_6 : f32 to vector<2x1xf32>
    %7 = arith.maximumf %5, %6 : vector<2x1xf32>
    %8 = tpu.reciprocal %7 : vector<2x1xf32> -> vector<2x1xf32>
    %9 = vector.broadcast %8 : vector<2x1xf32> to vector<2x32xf32>
    %10 = arith.mulf %4, %9 : vector<2x32xf32>
    %c0_7 = arith.constant 0 : index
    %c0_8 = arith.constant 0 : index
    %11 = vector.load %arg3[%c0_7, %c0_8] : memref<32x32xf32, #tpu.memory_space<vmem>>, vector<32x32xf32>
    %cst_9 = arith.constant dense<0.000000e+00> : vector<2x32xf32>
    %12 = tpu.matmul %10, %11, %cst_9 {dimension_numbers = #tpu.dot_dimension_numbers<[1], [1], [0], [0], [0, 0, 1, 0], [], []>} : vector<2x32xf32>, vector<32x32xf32>, vector<2x32xf32> -> vector<2x32xf32>
    %c0_10 = arith.constant 0 : index
    %c0_11 = arith.constant 0 : index
    %13 = vector.load %arg4[%c0_10, %c0_11] : memref<1x32xf32, #tpu.memory_space<vmem>>, vector<1x32xf32>
    %14 = vector.broadcast %13 : vector<1x32xf32> to vector<2x32xf32>
    %15 = arith.addf %12, %14 : vector<2x32xf32>
    %cst_12 = arith.constant 0.000000e+00 : f32
    %16 = vector.broadcast %cst_12 : f32 to vector<2x32xf32>
    %17 = arith.maximumf %15, %16 : vector<2x32xf32>
    %c0_13 = arith.constant 0 : index
    %c0_14 = arith.constant 0 : index
    %18 = vector.load %arg5[%c0_13, %c0_14] : memref<32x32xf32, #tpu.memory_space<vmem>>, vector<32x32xf32>
    %cst_15 = arith.constant dense<0.000000e+00> : vector<2x32xf32>
    %19 = tpu.matmul %17, %18, %cst_15 {dimension_numbers = #tpu.dot_dimension_numbers<[1], [1], [0], [0], [0, 0, 1, 0], [], []>} : vector<2x32xf32>, vector<32x32xf32>, vector<2x32xf32> -> vector<2x32xf32>
    %c0_16 = arith.constant 0 : index
    %c0_17 = arith.constant 0 : index
    %20 = vector.load %arg6[%c0_16, %c0_17] : memref<1x32xf32, #tpu.memory_space<vmem>>, vector<1x32xf32>
    %21 = vector.broadcast %20 : vector<1x32xf32> to vector<2x32xf32>
    %22 = arith.addf %19, %21 : vector<2x32xf32>
    %c0_18 = arith.constant 0 : index
    %c0_19 = arith.constant 0 : index
    %23 = vector.load %arg7[%c0_18, %c0_19] : memref<2x32xf32, #tpu.memory_space<vmem>>, vector<2x32xf32>
    tpu.vector_store %arg7[%c0_18, %c0_19], %22 {strides = array<i32>} : memref<2x32xf32, #tpu.memory_space<vmem>>, vector<2x32xf32>,
    return
  }
  func.func @transform_0(%arg0: i32) -> (i32, i32, i32) {
    %c0_i32 = arith.constant 0 : i32
    %c0_i32_0 = arith.constant 0 : i32
    %c0_i32_1 = arith.constant 0 : i32
    return %arg0, %c0_i32, %c0_i32_0 : i32, i32, i32
  }
  func.func @transform_1(%arg0: i32) -> (i32, i32, i32) {
    %c0_i32 = arith.constant 0 : i32
    %c0_i32_0 = arith.constant 0 : i32
    %c0_i32_1 = arith.constant 0 : i32
    return %arg0, %c0_i32, %c0_i32_0 : i32, i32, i32
  }
  func.func @transform_2(%arg0: i32) -> (i32, i32) {
    %c0_i32 = arith.constant 0 : i32
    %c0_i32_0 = arith.constant 0 : i32
    %c0_i32_1 = arith.constant 0 : i32
    return %c0_i32, %c0_i32_0 : i32, i32
  }
  func.func @transform_3(%arg0: i32) -> (i32, i32) {
    %c0_i32 = arith.constant 0 : i32
    %c0_i32_0 = arith.constant 0 : i32
    %c0_i32_1 = arith.constant 0 : i32
    return %c0_i32, %c0_i32_0 : i32, i32
  }
  func.func @transform_4(%arg0: i32) -> (i32, i32) {
    %c0_i32 = arith.constant 0 : i32
    %c0_i32_0 = arith.constant 0 : i32
    %c0_i32_1 = arith.constant 0 : i32
    return %c0_i32, %c0_i32_0 : i32, i32
  }
  func.func @transform_5(%arg0: i32) -> (i32, i32) {
    %c0_i32 = arith.constant 0 : i32
    %c0_i32_0 = arith.constant 0 : i32
    %c0_i32_1 = arith.constant 0 : i32
    return %c0_i32, %c0_i32_0 : i32, i32
  }
  func.func @transform_6(%arg0: i32) -> (i32, i32) {
    %c0_i32 = arith.constant 0 : i32
    %c0_i32_0 = arith.constant 0 : i32
    return %arg0, %c0_i32 : i32, i32
  }
}

</mosaic_0001>

<llo_original>
// kernel: lang_project.1
$region0: #{lang_project.1}
  #allocation0 [shape = 'u32[]', space=smem, size = 0x4, offset = 0x4, fixed_abs, tag = 'smem constant byte address 0x4 - core index']
  #allocation1 [shape = 'u32[72,128]{1,0:T(1,128)}', space=vmem, size = 0x9000, scoped, tag = 'internal scratch']
  %s0 = inlined_call_operand.vmem [shape: f32[2,8,32], index: 0, kind: input, shape index: {}]
  %s1 = inlined_call_operand.vmem [shape: f32[2,8,1], index: 1, kind: input, shape index: {}]
  %s2 = inlined_call_operand.hbm [shape: f32[32,32], index: 2, kind: input, shape index: {}]
  %s3 = inlined_call_operand.vmem [shape: f32[1,32], index: 3, kind: input, shape index: {}]
  %s4 = inlined_call_operand.hbm [shape: f32[32,32], index: 4, kind: input, shape index: {}]
  %s5 = inlined_call_operand.vmem [shape: f32[1,32], index: 5, kind: input, shape index: {}]
  %s6 = inlined_call_operand.hbm [shape: f32[2,32], index: 6, kind: output, shape index: {}]
  %s7 = sld [smem:[#allocation0]]
  $region42: #{lang_project.1} parent=0
    _
  %s9 = ssub.s32 1, %s7
  %s10 = scalar_select 0, %s9, %s7
  $region1: #{lang_project.1} parent=0
    #allocation2 [shape = 'u8[16384]{0}', space=vmem, size = 0x4000, scoped, tag = 'input window, operand 2, single buffered']
    #allocation3 [shape = 's32[1]{0}', space=sflag, size = 0x4, scoped, tag = 'scoped memory for lang_project.1']
    #allocation4 [shape = 's32[1]{0}', space=sflag, size = 0x4, scoped, tag = 'scoped memory for lang_project.1']
    #allocation5 [shape = 'u8[16384]{0}', space=vmem, size = 0x4000, scoped, tag = 'input window, operand 4, single buffered']
    #allocation6 [shape = 's32[1]{0}', space=sflag, size = 0x4, scoped, tag = 'scoped memory for lang_project.1']
    #allocation7 [shape = 'u8[1024]{0}', space=vmem, size = 0x400, scoped, tag = 'output window, operand 0, single buffered']
    %11 = vsyncpa [#allocation3], 0
    %12 = vsyncpa [#allocation6], 0
    %13 = vsyncpa [#allocation4], 0
    // Predicated region
    $region2: #{lang_project.1} parent=1 // pred_check
      _
    $region3: #{lang_project.1} parent=1 // pred_check_branch
      %15 = sbr.rel (0) target = $region5
    $region4: #{lang_project.1} parent=1 // pred_region
      _
    $region5: #{lang_project.1} parent=1 // pred_fallthru
      _
    // Predicated region
    $region6: #{lang_project.1} parent=1 // pred_check
      _
    $region7: #{lang_project.1} parent=1 // pred_check_branch
      %17 = sbr.rel (0) target = $region9
    $region8: #{lang_project.1} parent=1 // pred_region
      _
    $region9: #{lang_project.1} parent=1 // pred_fallthru
      _
    // Predicated region
    $region10: #{lang_project.1} parent=1 // pred_check
      _
    $region11: #{lang_project.1} parent=1 // pred_check_branch
      %19 = sbr.rel (0) target = $region13
    $region12: #{lang_project.1} parent=1 // pred_region
      %21 = vsyncadd [#allocation3], 0
      %s22 = sshll.u32 %s2, 4
      %s23 = int_to_ptr.hbm [resolvable:$true] %s22
      %s24 = sshll.u32 [#allocation2], 4
      %s25 = int_to_ptr.vmem [resolvable:$true] %s24
      %30 = dma.hbm_to_vmem [thread:$0]  %s23, 512, %s25, [#allocation3], 128, 128, 8
    $region13: #{lang_project.1} parent=1 // pred_fallthru
      _
    // Predicated region
    $region14: #{lang_project.1} parent=1 // pred_check
      _
    $region15: #{lang_project.1} parent=1 // pred_check_branch
      %32 = sbr.rel (0) target = $region17
    $region16: #{lang_project.1} parent=1 // pred_region
      _
    $region17: #{lang_project.1} parent=1 // pred_fallthru
      _
    // Predicated region
    $region18: #{lang_project.1} parent=1 // pred_check
      _
    $region19: #{lang_project.1} parent=1 // pred_check_branch
      %34 = sbr.rel (0) target = $region21
    $region20: #{lang_project.1} parent=1 // pred_region
      %36 = vsyncadd [#allocation6], 0
      %s37 = sshll.u32 %s4, 4
      %s38 = int_to_ptr.hbm [resolvable:$true] %s37
      %s39 = sshll.u32 [#allocation5], 4
      %s40 = int_to_ptr.vmem [resolvable:$true] %s39
      %45 = dma.hbm_to_vmem [thread:$0]  %s38, 512, %s40, [#allocation6], 128, 128, 8
    $region21: #{lang_project.1} parent=1 // pred_fallthru
      _
    // Predicated region
    $region22: #{lang_project.1} parent=1 // pred_check
      _
    $region23: #{lang_project.1} parent=1 // pred_check_branch
      %47 = sbr.rel (0) target = $region25
    $region24: #{lang_project.1} parent=1 // pred_region
      _
    $region25: #{lang_project.1} parent=1 // pred_fallthru
      _
    // Predicated region
    $region26: #{lang_project.1} parent=1 // pred_check
      _
    $region27: #{lang_project.1} parent=1 // pred_check_branch
      %49 = sbr.rel (0) target = $region29
    $region28: #{lang_project.1} parent=1 // pred_region
      %51 = dma.done [#allocation3], 512
    $region29: #{lang_project.1} parent=1 // pred_fallthru
      _
    // Predicated region
    $region30: #{lang_project.1} parent=1 // pred_check
      _
    $region31: #{lang_project.1} parent=1 // pred_check_branch
      %53 = sbr.rel (0) target = $region33
    $region32: #{lang_project.1} parent=1 // pred_region
      %55 = dma.done [#allocation6], 512
    $region33: #{lang_project.1} parent=1 // pred_fallthru
      _
    %v56 = vld [vmem:[%s0] sm:$0xff]
    %v57 = vld [vmem:[%s0 + $0x8] sm:$0xff]
    %v58 = vld [vmem:[%s1] sm:$0xff]
    %v59 = vld [vmem:[%s1 + $0x8] sm:$0xff]
    %61 = vset.pattern.permute.xlu0 0
    %62 = vperm.xlu0 %61, %v58
    %v63 = vpop.permute.xlu0 %62
    %66 = vset.pattern.permute.xlu0 0
    %67 = vperm.xlu0 %66, %v59
    %v68 = vpop.permute.xlu0 %67
    %v70 = vmul.f32 %v56, %v63
    %v71 = vmul.f32 %v57, %v68
    %vm72 = vcmask 261120
    %v73 = vsel %vm72, %v70, 0.0
    %v74 = vrot.slane %v73, 4
    %v75 = vadd.f32 %v73, %v74
    %v76 = vrot.slane %v75, 2
    %v77 = vadd.f32 %v75, %v76
    %v78 = vrot.slane %v77, 1
    %v79 = vadd.f32 %v77, %v78
    %v80 = vsel %vm72, %v71, 0.0
    %v81 = vrot.slane %v80, 4
    %v82 = vadd.f32 %v80, %v81
    %v83 = vrot.slane %v82, 2
    %v84 = vadd.f32 %v82, %v83
    %v85 = vrot.slane %v84, 1
    %v86 = vadd.f32 %v84, %v85
    %vm87 = vcmask 7168
    %v88 = vsel %vm87, %v58, 0.0
    %v89 = vrot.slane %v88, 4
    %v90 = vadd.f32 %v88, %v89
    %v91 = vrot.slane %v90, 2
    %v92 = vadd.f32 %v90, %v91
    %v93 = vrot.slane %v92, 1
    %v94 = vadd.f32 %v92, %v93
    %v95 = vsel %vm87, %v59, 0.0
    %v96 = vrot.slane %v95, 4
    %v97 = vadd.f32 %v95, %v96
    %v98 = vrot.slane %v97, 2
    %v99 = vadd.f32 %v97, %v98
    %v100 = vrot.slane %v99, 1
    %v101 = vadd.f32 %v99, %v100
    %v102 = vmax.f32 %v94, 1.0
    %v103 = vmax.f32 %v101, 1.0
    %v104 = vrcp.pop %v102
    %v105 = vmul.f32 %v102, %v104
    %v106 = vsub.f32 1.0, %v105
    %v107 = vmul.f32 %v104, %v106
    %v108 = vadd.f32 %v104, %v107
    %vm109 = vweird.f32 %v102
    %vm110 = vweird.f32 %v104
    %vm111 = vmor %vm109, %vm110
    %v112 = vsel %vm111, %v104, %v108
    %v113 = vand.u32 2147483647, %v102
    %vm114 = vcmp.eq.f32.partialorder %v113, 8.507059e+37
    %v115 = vand.u32 %v102, 2147483648
    %v116 = vor.u32 1.1754944e-38, %v115
    %v117 = vsel %vm114, %v116, %v112
    %v118 = vrcp.pop %v103
    %v119 = vmul.f32 %v103, %v118
    %v120 = vsub.f32 1.0, %v119
    %v121 = vmul.f32 %v118, %v120
    %v122 = vadd.f32 %v118, %v121
    %vm123 = vweird.f32 %v103
    %vm124 = vweird.f32 %v118
    %vm125 = vmor %vm123, %vm124
    %v126 = vsel %vm125, %v118, %v122
    %v127 = vand.u32 2147483647, %v103
    %vm128 = vcmp.eq.f32.partialorder %v127, 8.507059e+37
    %v129 = vand.u32 %v103, 2147483648
    %v130 = vor.u32 1.1754944e-38, %v129
    %v131 = vsel %vm128, %v130, %v126
    %133 = vset.pattern.permute.xlu0 0
    %134 = vperm.xlu0 %133, %v117
    %v135 = vpop.permute.xlu0 %134
    %138 = vset.pattern.permute.xlu0 0
    %139 = vperm.xlu0 %138, %v131
    %v140 = vpop.permute.xlu0 %139
    %v142 = vmul.f32 %v79, %v135
    %v143 = vmul.f32 %v86, %v140
    %v144 = vld [vmem:[#allocation2] sm:$0xff]
    %v145 = vld [vmem:[#allocation2 + $0x8] sm:$0xff]
    %v146 = vld [vmem:[#allocation2 + $0x10] sm:$0xff]
    %v147 = vld [vmem:[#allocation2 + $0x18] sm:$0xff]
    %v148 = vld [vmem:[%s3] sm:$0x1]
    %v150 = vperm.slane %v148, 0
    %vm154 = vcmask 1041409
    %v155 = vsel %vm154, %v143, %v142
    %v156 = vsel %vm72, %v155, 0
    %v159 = vsel %vm72, %v144, 0
    %v162 = vsel %vm72, %v145, 0
    %v165 = vsel %vm72, %v146, 0
    %v168 = vsel %vm72, %v147, 0
    %170 = vmatpush.xpose.msra.mxu0 0.0
    %171 = vmatpush.xpose.msra.mxu0 0.0
    %172 = vmatpush.xpose.msra.mxu0 0.0
    %173 = vmatpush.xpose.msra.mxu0 0.0
    %174 = vmatpush.xpose.msra.mxu0 0.0
    %175 = vmatpush.xpose.msra.mxu0 0.0
    %176 = vmatpush.xpose.msra.mxu0 0.0
    %177 = vmatpush.xpose.msra.mxu0 0.0
    %178 = vmatpush.xpose.msra.mxu0 0.0
    %179 = vmatpush.xpose.msra.mxu0 0.0
    %180 = vmatpush.xpose.msra.mxu0 0.0
    %181 = vmatpush.xpose.msra.mxu0 0.0
    %182 = vmatpush.xpose.msra.mxu0 %v168
    %183 = vmatpush.xpose.msra.mxu0 %v165
    %184 = vmatpush.xpose.msra.mxu0 %v162
    %185 = vmatpush.xpose.msra.mxu0 %v159
    %186 = vmatmul.f32.gmra.mxu0 %v156
    %v187 = vpop.f32.mrf.mxu0
    %v188 = vadd.f32 %v150, %v187
    %189 = vdwg.mxu0
    %v190 = vmax.f32 %v188, 0.0
    %v191 = vld [vmem:[#allocation5] sm:$0xff]
    %v192 = vld [vmem:[#allocation5 + $0x8] sm:$0xff]
    %v193 = vld [vmem:[#allocation5 + $0x10] sm:$0xff]
    %v194 = vld [vmem:[#allocation5 + $0x18] sm:$0xff]
    %v195 = vld [vmem:[%s5] sm:$0x1]
    %v197 = vperm.slane %v195, 0
    %v200 = vsel %vm72, %v190, 0
    %v203 = vsel %vm72, %v191, 0
    %v206 = vsel %vm72, %v192, 0
    %v209 = vsel %vm72, %v193, 0
    %v212 = vsel %vm72, %v194, 0
    %214 = vmatpush.xpose.msra.mxu0 0.0
    %215 = vmatpush.xpose.msra.mxu0 0.0
    %216 = vmatpush.xpose.msra.mxu0 0.0
    %217 = vmatpush.xpose.msra.mxu0 0.0
    %218 = vmatpush.xpose.msra.mxu0 0.0
    %219 = vmatpush.xpose.msra.mxu0 0.0
    %220 = vmatpush.xpose.msra.mxu0 0.0
    %221 = vmatpush.xpose.msra.mxu0 0.0
    %222 = vmatpush.xpose.msra.mxu0 0.0
    %223 = vmatpush.xpose.msra.mxu0 0.0
    %224 = vmatpush.xpose.msra.mxu0 0.0
    %225 = vmatpush.xpose.msra.mxu0 0.0
    %226 = vmatpush.xpose.msra.mxu0 %v212
    %227 = vmatpush.xpose.msra.mxu0 %v209
    %228 = vmatpush.xpose.msra.mxu0 %v206
    %229 = vmatpush.xpose.msra.mxu0 %v203
    %230 = vmatmul.f32.gmra.mxu0 %v200
    %v231 = vpop.f32.mrf.mxu0
    %v232 = vadd.f32 %v197, %v231
    %233 = vdwg.mxu0
    %vm234 = vcmask 254976
    %235 = vst.msk [vmem:[#allocation7] sm:$0x3] %vm234, %v232
    // Predicated region
    $region34: #{lang_project.1} parent=1 // pred_check
      _
    $region35: #{lang_project.1} parent=1 // pred_check_branch
      %237 = sbr.rel (0) target = $region37
    $region36: #{lang_project.1} parent=1 // pred_region
      %239 = vsyncadd [#allocation4], 0
      %s241 = sshll.u32 [#allocation7], 4
      %s242 = int_to_ptr.vmem [resolvable:$true] %s241
      %s243 = sshll.u32 %s6, 4
      %s244 = int_to_ptr.hbm [resolvable:$true] %s243
      %246 = dma.vmem_to_hbm [thread:$0]  %s242, 32, %s244, [#allocation4]
    $region37: #{lang_project.1} parent=1 // pred_fallthru
      _
    // Predicated region
    $region38: #{lang_project.1} parent=1 // pred_check
      _
    $region39: #{lang_project.1} parent=1 // pred_check_branch
      %248 = sbr.rel (0) target = $region41
    $region40: #{lang_project.1} parent=1 // pred_region
      %250 = dma.done [#allocation4], 32
    $region41: #{lang_project.1} parent=1 // pred_fallthru
      _
    %251 = vsyncpa [#allocation3], 1
    %252 = vsyncpa [#allocation6], 1
    %253 = vsyncpa [#allocation4], 1

</llo_original>
